<compile_context>
chip_gen: v5e
topology: v5e:2x2
jax: 0.10.0
libtpu: 0.0.40
codegen_flags: <defaults>
</compile_context>

<pallas_src>
import functools

import jax
import jax.numpy as jnp
from jax.experimental import pallas as pl
from jax.experimental.pallas import tpu as pltpu

LANES = 128
ACC_ROWS = 32                         # resident accumulator height (4 sublane groups)
MAX_TILE_ROWS = 8192                  # absolute cap on tile height
VMEM_INPUT_BUDGET = 10 * 1024 * 1024  # double-buffered input bytes (v5e-safe)
EPS = 1e-7


def _round_up(x, m):
    return -(-x // m) * m


# ------------------------------- kernel ------------------------------------ #

def _bce_partial_kernel(yt_ref, yp_ref, out_ref, *,
                        weight_positive, inv_n, binary_labels):
    """Grid = (num_splits [parallel], tiles_per_split [arbitrary]).

    The (ACC_ROWS, LANES) output block is resident across the inner reduction
    axis and acts as a wide vreg-shaped accumulator.  There is NO validity
    mask: padding is self-masking (y_pred padded with EPS, y_true with 0 makes
    every padded element's term exactly 0 in both label paths).
    """
    i = pl.program_id(1)

    @pl.when(i == 0)
    def _():
        out_ref[...] = jnp.zeros_like(out_ref)

    yp = yp_ref[...].astype(jnp.float32)
    eps = jnp.float32(EPS)
    wp = jnp.float32(weight_positive)

    if binary_labels:
        # One transcendental + minimal VPU passes; exact for hard {0,1} labels.
        yt = yt_ref[...]
        if jnp.issubdtype(yt.dtype, jnp.floating):
            pos = yt > jnp.asarray(0.5, yt.dtype)   # compare in native dtype (no cast pass)
        else:
            pos = yt > 0                            # int8 / bool label stream
        arg = jnp.where(pos, yp, 1.0 - yp) + eps    # single add
        w = jnp.where(pos, -wp, jnp.float32(-1.0))  # negation folded into select
        term = w * jnp.log(arg)
    else:
        # Exact PyTorch two-log formula (supports soft labels).
        yt = yt_ref[...].astype(jnp.float32)
        term = -(wp * yt * jnp.log(yp + eps)
                 + (1.0 - yt) * jnp.log(1.0 - yp + eps))

    tile_rows = term.shape[0]
    # Wide vreg-shaped accumulation: 4 independent sublane chains per step.
    out_ref[...] += jnp.sum(
        term.reshape(tile_rows // ACC_ROWS, ACC_ROWS, LANES), axis=0)

    @pl.when(i == pl.num_programs(1) - 1)
    def _():
        # Fold the 1/N mean scaling into the kernel epilogue.
        out_ref[...] = out_ref[...] * jnp.float32(inv_n)


# ------------------------------ wrappers ------------------------------------ #

def _to_slab(x, padded_rows, dtype, pad_value):
    """Row-major flatten to (padded_rows, 128); skip cast/pad copies when possible."""
    flat = jnp.reshape(x, (-1,))
    if flat.dtype != jnp.dtype(dtype):
        flat = flat.astype(dtype)
    total = padded_rows * LANES
    if total != flat.shape[0]:
        flat = jnp.pad(flat, (0, total - flat.shape[0]), constant_values=pad_value)
    return flat.reshape(padded_rows, LANES)


def _weighted_bce_mean(y_true, y_pred, weight_positive, binary_labels):
    n = int(y_true.size)
    assert int(y_pred.size) == n and n > 0

    # Stream dtypes: avoid wrapper-side full-array casts wherever possible.
    yp_dtype = y_pred.dtype if jnp.issubdtype(y_pred.dtype, jnp.floating) else jnp.float32
    if binary_labels:
        if jnp.issubdtype(y_true.dtype, jnp.floating):
            yt_dtype = y_true.dtype        # stream as-is; threshold in-kernel
        else:
            yt_dtype = jnp.int8            # bool / int labels -> 1 B/elem stream
    else:
        yt_dtype = (y_true.dtype if jnp.issubdtype(y_true.dtype, jnp.floating)
                    else jnp.float32)

    # Tile height from a VMEM budget (2 streams x 2 pipeline buffers).
    rows_needed = pl.cdiv(n, LANES)
    bytes_per_row = LANES * (jnp.dtype(yt_dtype).itemsize
                             + jnp.dtype(yp_dtype).itemsize)
    cap = VMEM_INPUT_BUDGET // (2 * bytes_per_row)
    cap = max(ACC_ROWS, (cap // ACC_ROWS) * ACC_ROWS)
    cap = min(cap, MAX_TILE_ROWS)
    tile_rows = min(cap, _round_up(rows_needed, ACC_ROWS))

    total_tiles = pl.cdiv(rows_needed, tile_rows)
    num_splits = 2 if total_tiles >= 2 else 1     # v7x: 2 TCs; harmless elsewhere
    tiles_per_split = pl.cdiv(total_tiles, num_splits)
    padded_rows = num_splits * tiles_per_split * tile_rows

    # Self-masking padding: y_true -> 0, y_pred -> EPS  =>  padded term == 0.
    yt2d = _to_slab(y_true, padded_rows, yt_dtype, 0)
    yp2d = _to_slab(y_pred, padded_rows, yp_dtype, EPS)

    kernel = functools.partial(
        _bce_partial_kernel,
        weight_positive=float(weight_positive),
        inv_n=1.0 / n,
        binary_labels=binary_labels,
    )

    in_map = lambda c, i: (c * tiles_per_split + i, 0)

    partials = pl.pallas_call(
        kernel,
        out_shape=jax.ShapeDtypeStruct((num_splits * ACC_ROWS, LANES), jnp.float32),
        grid_spec=pltpu.PrefetchScalarGridSpec(
            num_scalar_prefetch=0,
            grid=(num_splits, tiles_per_split),
            in_specs=[
                pl.BlockSpec((tile_rows, LANES), in_map),
                pl.BlockSpec((tile_rows, LANES), in_map),
            ],
            out_specs=pl.BlockSpec((ACC_ROWS, LANES), lambda c, i: (c, 0)),
        ),
        compiler_params=pltpu.CompilerParams(
            dimension_semantics=("parallel", "arbitrary"),
            vmem_limit_bytes=32 * 1024 * 1024),
    )(yt2d, yp2d)

    # 1/N already folded in-kernel; only a tiny final cross-lane reduce remains.
    return jnp.sum(partials)


class WeightedBinaryCrossEntropyLossWithRegularization:
    """JAX/Pallas equivalent of the PyTorch module.

    `model_params` is a list of parameter arrays (stands in for model.parameters()).
    Set `binary_labels=True` only when y_true is guaranteed hard {0,1}; it enables
    the one-log-per-element path (exact for hard labels; NOT valid for soft labels).
    """

    def __init__(self, weight_positive, lambda_reg, binary_labels=False):
        self.weight_positive = float(weight_positive)
        self.lambda_reg = float(lambda_reg)
        self.binary_labels = bool(binary_labels)

    def __call__(self, y_true, y_pred, model_params):
        bce = _weighted_bce_mean(y_true, y_pred, self.weight_positive,
                                 self.binary_labels)

        # Per perf review: per-parameter L2 norms over tiny tensors are cheaper
        # in plain XLA than one pallas_call launch per parameter.
        reg = jnp.float32(0.0)
        for p in model_params:
            pf = jnp.asarray(p, jnp.float32)
            reg = reg + jnp.sqrt(jnp.sum(pf * pf))

        return bce + jnp.float32(self.lambda_reg) * reg


# -------------------------------- main -------------------------------------- #

if __name__ == "__main__":
    key = jax.random.PRNGKey(0)
    k1, k2, k3, k4, k5, k6 = jax.random.split(key, 6)

    # labels / predictions: NCHW, batch=2, channels=4, spatial=16
    y_true = (jax.random.uniform(k1, (2, 4, 16, 16)) > 0.5).astype(jnp.float32)
    y_pred = jax.nn.sigmoid(jax.random.normal(k2, (2, 4, 16, 16), jnp.float32))

    # deterministic synthetic "model" parameters (stand-in for model.parameters())
    model_params = [
        0.1 * jax.random.normal(k3, (4, 4, 3, 3), jnp.float32),   # conv weight
        0.01 * jax.random.normal(k4, (4,), jnp.float32),          # conv bias
        0.1 * jax.random.normal(k5, (32, 64), jnp.float32),       # linear weight
        0.01 * jax.random.normal(k6, (64,), jnp.float32),         # linear bias
    ]

    loss_fn = WeightedBinaryCrossEntropyLossWithRegularization(
        weight_positive=2.0, lambda_reg=1e-3, binary_labels=True)

    total_loss = loss_fn(y_true, y_pred, model_params)
    total_loss = jax.block_until_ready(total_loss)

    # pure-JAX reference check (exact PyTorch two-log formula)
    eps = 1e-7
    ref_bce = jnp.mean(-(2.0 * y_true * jnp.log(y_pred + eps)
                         + (1.0 - y_true) * jnp.log(1.0 - y_pred + eps)))
    ref_reg = sum(jnp.sqrt(jnp.sum(p.astype(jnp.float32) ** 2)) for p in model_params)
    ref = ref_bce + 1e-3 * ref_reg
    assert jnp.allclose(total_loss, ref, rtol=1e-5, atol=1e-5), (total_loss, ref)

    print("KERNEL_OK")
</pallas_src>

<mosaic_0001>
module attributes {stable_mosaic.version = 11 : i64} {
  func.func @_bce_partial_kernel(%arg0: i32, %arg1: i32, %arg2: memref<32x128xf32, #tpu.memory_space<vmem>>, %arg3: memref<32x128xf32, #tpu.memory_space<vmem>>, %arg4: memref<32x128xf32, #tpu.memory_space<vmem>>) attributes {dimension_semantics = [#tpu.dimension_semantics<parallel>, #tpu.dimension_semantics<arbitrary>], iteration_bounds = array<i64: 1, 1>, scalar_prefetch = 0 : i64, scratch_operands = 0 : i64, tpu.core_type = #tpu.core_type<tc>, window_params = [{transform_indices = @transform_0, window_bounds = array<i64: 32, 128>}, {transform_indices = @transform_1, window_bounds = array<i64: 32, 128>}, {transform_indices = @transform_2, window_bounds = array<i64: 32, 128>}]} {
    %c0_i32 = arith.constant 0 : i32
    %0 = arith.cmpi eq, %arg1, %c0_i32 : i32
    %1 = arith.extui %0 : i1 to i32
    %c0_i32_0 = arith.constant 0 : i32
    %2 = arith.cmpi ne, %1, %c0_i32_0 : i32
    scf.if %2 {
      %cst_16 = arith.constant 0.000000e+00 : f32
      %26 = vector.broadcast %cst_16 : f32 to vector<32x128xf32>
      %c0_17 = arith.constant 0 : index
      %c0_18 = arith.constant 0 : index
      %27 = vector.load %arg4[%c0_17, %c0_18] : memref<32x128xf32, #tpu.memory_space<vmem>>, vector<32x128xf32>
      tpu.vector_store %arg4[%c0_17, %c0_18], %26 {strides = array<i32>} : memref<32x128xf32, #tpu.memory_space<vmem>>, vector<32x128xf32>,
    } else {
    }
    %c0 = arith.constant 0 : index
    %c0_1 = arith.constant 0 : index
    %3 = vector.load %arg3[%c0, %c0_1] : memref<32x128xf32, #tpu.memory_space<vmem>>, vector<32x128xf32>
    %c0_2 = arith.constant 0 : index
    %c0_3 = arith.constant 0 : index
    %4 = vector.load %arg2[%c0_2, %c0_3] : memref<32x128xf32, #tpu.memory_space<vmem>>, vector<32x128xf32>
    %cst = arith.constant 5.000000e-01 : f32
    %5 = vector.broadcast %cst : f32 to vector<32x128xf32>
    %6 = arith.cmpf ogt, %4, %5 : vector<32x128xf32>
    %cst_4 = arith.constant 1.000000e+00 : f32
    %7 = vector.broadcast %cst_4 : f32 to vector<32x128xf32>
    %8 = arith.subf %7, %3 : vector<32x128xf32>
    %9 = arith.select %6, %3, %8 : vector<32x128xi1>, vector<32x128xf32>
    %cst_5 = arith.constant 1.000000e-07 : f32
    %10 = vector.broadcast %cst_5 : f32 to vector<32x128xf32>
    %11 = arith.addf %9, %10 : vector<32x128xf32>
    %cst_6 = arith.constant 0.000000e+00 : f32
    %cst_7 = arith.constant 2.000000e+00 : f32
    %12 = arith.subf %cst_6, %cst_7 : f32
    %cst_8 = arith.constant -1.000000e+00 : f32
    %13 = vector.broadcast %12 : f32 to vector<32x128xf32>
    %14 = vector.broadcast %cst_8 : f32 to vector<32x128xf32>
    %15 = arith.select %6, %13, %14 : vector<32x128xi1>, vector<32x128xf32>
    %16 = math.log %11 : vector<32x128xf32>
    %17 = arith.mulf %15, %16 : vector<32x128xf32>
    %c0_9 = arith.constant 0 : index
    %c0_10 = arith.constant 0 : index
    %18 = vector.load %arg4[%c0_9, %c0_10] : memref<32x128xf32, #tpu.memory_space<vmem>>, vector<32x128xf32>
    %19 = vector.shape_cast %17 : vector<32x128xf32> to vector<1x32x128xf32>
    %cst_11 = arith.constant dense<0.000000e+00> : vector<32x128xf32>
    %20 = vector.multi_reduction <add>, %19, %cst_11 [0] : vector<1x32x128xf32> to vector<32x128xf32>
    %21 = arith.addf %18, %20 : vector<32x128xf32>
    %c0_12 = arith.constant 0 : index
    %c0_13 = arith.constant 0 : index
    %22 = vector.load %arg4[%c0_12, %c0_13] : memref<32x128xf32, #tpu.memory_space<vmem>>, vector<32x128xf32>
    tpu.vector_store %arg4[%c0_12, %c0_13], %21 {strides = array<i32>} : memref<32x128xf32, #tpu.memory_space<vmem>>, vector<32x128xf32>,
    %c0_i32_14 = arith.constant 0 : i32
    %23 = arith.cmpi eq, %arg1, %c0_i32_14 : i32
    %24 = arith.extui %23 : i1 to i32
    %c0_i32_15 = arith.constant 0 : i32
    %25 = arith.cmpi ne, %24, %c0_i32_15 : i32
    scf.if %25 {
      %c0_16 = arith.constant 0 : index
      %c0_17 = arith.constant 0 : index
      %26 = vector.load %arg4[%c0_16, %c0_17] : memref<32x128xf32, #tpu.memory_space<vmem>>, vector<32x128xf32>
      %cst_18 = arith.constant 4.8828125E-4 : f32
      %27 = vector.broadcast %cst_18 : f32 to vector<32x128xf32>
      %28 = arith.mulf %26, %27 : vector<32x128xf32>
      %c0_19 = arith.constant 0 : index
      %c0_20 = arith.constant 0 : index
      %29 = vector.load %arg4[%c0_19, %c0_20] : memref<32x128xf32, #tpu.memory_space<vmem>>, vector<32x128xf32>
      tpu.vector_store %arg4[%c0_19, %c0_20], %28 {strides = array<i32>} : memref<32x128xf32, #tpu.memory_space<vmem>>, vector<32x128xf32>,
    } else {
    }
    return
  }
  func.func @transform_0(%arg0: i32, %arg1: i32) -> (i32, i32) {
    %c1_i32 = arith.constant 1 : i32
    %0 = arith.muli %arg0, %c1_i32 : i32
    %1 = arith.addi %0, %arg1 : i32
    %c0_i32 = arith.constant 0 : i32
    %c0_i32_0 = arith.constant 0 : i32
    return %1, %c0_i32 : i32, i32
  }
  func.func @transform_1(%arg0: i32, %arg1: i32) -> (i32, i32) {
    %c1_i32 = arith.constant 1 : i32
    %0 = arith.muli %arg0, %c1_i32 : i32
    %1 = arith.addi %0, %arg1 : i32
    %c0_i32 = arith.constant 0 : i32
    %c0_i32_0 = arith.constant 0 : i32
    return %1, %c0_i32 : i32, i32
  }
  func.func @transform_2(%arg0: i32, %arg1: i32) -> (i32, i32) {
    %c0_i32 = arith.constant 0 : i32
    %c0_i32_0 = arith.constant 0 : i32
    return %arg0, %c0_i32 : i32, i32
  }
}

</mosaic_0001>

<llo_original>
// kernel: tpu_custom_call.1
$region0: #{tpu_custom_call.1}
  #allocation0 [shape = 'u32[]', space=smem, size = 0x4, offset = 0x4, fixed_abs, tag = 'smem constant byte address 0x4 - core index']
  #allocation1 [shape = 'u32[72,128]{1,0:T(1,128)}', space=vmem, size = 0x9000, scoped, tag = 'internal scratch']
  %s0 = inlined_call_operand.hbm [shape: f32[32,128], index: 0, kind: input, shape index: {}]
  %s1 = inlined_call_operand.hbm [shape: f32[32,128], index: 1, kind: input, shape index: {}]
  %s2 = inlined_call_operand.hbm [shape: f32[32,128], index: 2, kind: output, shape index: {}]
  %s3 = sld [smem:[#allocation0]]
  $region34: #{tpu_custom_call.1} parent=0
    _
  %s5 = ssub.s32 1, %s3
  %s6 = scalar_select 0, %s5, %s3
  $region1: #{tpu_custom_call.1} parent=0
    #allocation2 [shape = 'u8[16384]{0}', space=vmem, size = 0x4000, scoped, tag = 'input window, operand 0, single buffered']
    #allocation3 [shape = 's32[1]{0}', space=sflag, size = 0x4, scoped, tag = 'scoped memory for tpu_custom_call.1']
    #allocation4 [shape = 's32[1]{0}', space=sflag, size = 0x4, scoped, tag = 'scoped memory for tpu_custom_call.1']
    #allocation5 [shape = 'u8[16384]{0}', space=vmem, size = 0x4000, scoped, tag = 'input window, operand 1, single buffered']
    #allocation6 [shape = 's32[1]{0}', space=sflag, size = 0x4, scoped, tag = 'scoped memory for tpu_custom_call.1']
    #allocation7 [shape = 'u8[16384]{0}', space=vmem, size = 0x4000, scoped, tag = 'output window, operand 0, single buffered']
    %7 = vsyncpa [#allocation3], 0
    %8 = vsyncpa [#allocation6], 0
    %9 = vsyncpa [#allocation4], 0
    // Predicated region
    $region2: #{tpu_custom_call.1} parent=1 // pred_check
      _
    $region3: #{tpu_custom_call.1} parent=1 // pred_check_branch
      %11 = sbr.rel (0) target = $region5
    $region4: #{tpu_custom_call.1} parent=1 // pred_region
      %s12 = sadd.s32 0, 0
      %s13 = smul.u32 4, %s12
      %15 = vsyncadd [#allocation3], 0
      %s16 = smul.addr %s13, 8
      %s17 = scalar_lea.hbm %s0, %s16
      %s18 = sshll.u32 %s17, 4
      %s19 = int_to_ptr.hbm [resolvable:$true] %s18
      %s20 = sshll.u32 [#allocation2], 4
      %s21 = int_to_ptr.vmem [resolvable:$true] %s20
      %26 = dma.hbm_to_vmem [thread:$0]  %s19, 512, %s21, [#allocation3], 128, 128, 8
    $region5: #{tpu_custom_call.1} parent=1 // pred_fallthru
      _
    // Predicated region
    $region6: #{tpu_custom_call.1} parent=1 // pred_check
      _
    $region7: #{tpu_custom_call.1} parent=1 // pred_check_branch
      %28 = sbr.rel (0) target = $region9
    $region8: #{tpu_custom_call.1} parent=1 // pred_region
      %s29 = sadd.s32 0, 0
      %s30 = smul.u32 4, %s29
      %32 = vsyncadd [#allocation6], 0
      %s33 = smul.addr %s30, 8
      %s34 = scalar_lea.hbm %s1, %s33
      %s35 = sshll.u32 %s34, 4
      %s36 = int_to_ptr.hbm [resolvable:$true] %s35
      %s37 = sshll.u32 [#allocation5], 4
      %s38 = int_to_ptr.vmem [resolvable:$true] %s37
      %43 = dma.hbm_to_vmem [thread:$0]  %s36, 512, %s38, [#allocation6], 128, 128, 8
    $region9: #{tpu_custom_call.1} parent=1 // pred_fallthru
      _
    // Predicated region
    $region10: #{tpu_custom_call.1} parent=1 // pred_check
      _
    $region11: #{tpu_custom_call.1} parent=1 // pred_check_branch
      %45 = sbr.rel (0) target = $region13
    $region12: #{tpu_custom_call.1} parent=1 // pred_region
      %47 = dma.done [#allocation3], 512
    $region13: #{tpu_custom_call.1} parent=1 // pred_fallthru
      _
    // Predicated region
    $region14: #{tpu_custom_call.1} parent=1 // pred_check
      _
    $region15: #{tpu_custom_call.1} parent=1 // pred_check_branch
      %49 = sbr.rel (0) target = $region17
    $region16: #{tpu_custom_call.1} parent=1 // pred_region
      %51 = dma.done [#allocation6], 512
    $region17: #{tpu_custom_call.1} parent=1 // pred_fallthru
      _
    %s52 = sadd.s32 0, 0
    %s53 = smul.u32 4, %s52
    %s54 = sadd.s32 0, 0
    %s55 = smul.u32 4, %s54
    %p56 = scmp.eq.s32.totalorder 0, 0
    // Predicated region
    $region18: #{tpu_custom_call.1} parent=1 // pred_check
      %p57 = pneg %p56
    $region19: #{tpu_custom_call.1} parent=1 // pred_check_branch
      %59 = sbr.rel (%p57) target = $region21
    $region20: #{tpu_custom_call.1} parent=1 // pred_region
      %60 = vst [vmem:[#allocation7] sm:$0xff] 0.0
      %61 = vst [vmem:[#allocation7 + $0x8] sm:$0xff] 0.0
      %62 = vst [vmem:[#allocation7 + $0x10] sm:$0xff] 0.0
      %63 = vst [vmem:[#allocation7 + $0x18] sm:$0xff] 0.0
    $region21: #{tpu_custom_call.1} parent=1 // pred_fallthru
      _
    %v64 = vld [vmem:[#allocation5] sm:$0xff]
    %v65 = vld [vmem:[#allocation5 + $0x8] sm:$0xff]
    %v66 = vld [vmem:[#allocation5 + $0x10] sm:$0xff]
    %v67 = vld [vmem:[#allocation5 + $0x18] sm:$0xff]
    %v68 = vld [vmem:[#allocation2] sm:$0xff]
    %v69 = vld [vmem:[#allocation2 + $0x8] sm:$0xff]
    %v70 = vld [vmem:[#allocation2 + $0x10] sm:$0xff]
    %v71 = vld [vmem:[#allocation2 + $0x18] sm:$0xff]
    %vm72 = vcmp.gt.f32.partialorder %v68, 0.5
    %vm73 = vcmp.gt.f32.partialorder %v69, 0.5
    %vm74 = vcmp.gt.f32.partialorder %v70, 0.5
    %vm75 = vcmp.gt.f32.partialorder %v71, 0.5
    %v76 = vsub.f32 1.0, %v64
    %v77 = vsub.f32 1.0, %v65
    %v78 = vsub.f32 1.0, %v66
    %v79 = vsub.f32 1.0, %v67
    %v80 = vsel %vm72, %v64, %v76
    %v81 = vsel %vm73, %v65, %v77
    %v82 = vsel %vm74, %v66, %v78
    %v83 = vsel %vm75, %v67, %v79
    %v84 = vadd.f32 %v80, 1e-07
    %v85 = vadd.f32 %v81, 1e-07
    %v86 = vadd.f32 %v82, 1e-07
    %v87 = vadd.f32 %v83, 1e-07
    %v88 = vsel %vm72, -2.0, -1.0
    %v89 = vsel %vm73, -2.0, -1.0
    %v90 = vsel %vm74, -2.0, -1.0
    %v91 = vsel %vm75, -2.0, -1.0
    %v92 = vlog2.pop %v84
    %v93 = vmul.f32 %v92, 0.6931472
    %v94 = vlog2.pop %v85
    %v95 = vmul.f32 %v94, 0.6931472
    %v96 = vlog2.pop %v86
    %v97 = vmul.f32 %v96, 0.6931472
    %v98 = vlog2.pop %v87
    %v99 = vmul.f32 %v98, 0.6931472
    %v100 = vmul.f32 %v88, %v93
    %v101 = vmul.f32 %v89, %v95
    %v102 = vmul.f32 %v90, %v97
    %v103 = vmul.f32 %v91, %v99
    %v104 = vld [vmem:[#allocation7] sm:$0xff]
    %v105 = vld [vmem:[#allocation7 + $0x8] sm:$0xff]
    %v106 = vld [vmem:[#allocation7 + $0x10] sm:$0xff]
    %v107 = vld [vmem:[#allocation7 + $0x18] sm:$0xff]
    %v108 = vadd.f32 %v100, 0.0
    %v109 = vadd.f32 %v101, 0.0
    %v110 = vadd.f32 %v102, 0.0
    %v111 = vadd.f32 %v103, 0.0
    %v112 = vadd.f32 %v104, %v108
    %v113 = vadd.f32 %v105, %v109
    %v114 = vadd.f32 %v106, %v110
    %v115 = vadd.f32 %v107, %v111
    %116 = vst [vmem:[#allocation7] sm:$0xff] %v112
    %117 = vst [vmem:[#allocation7 + $0x8] sm:$0xff] %v113
    %118 = vst [vmem:[#allocation7 + $0x10] sm:$0xff] %v114
    %119 = vst [vmem:[#allocation7 + $0x18] sm:$0xff] %v115
    // Predicated region
    $region22: #{tpu_custom_call.1} parent=1 // pred_check
      %p120 = pneg %p56
    $region23: #{tpu_custom_call.1} parent=1 // pred_check_branch
      %122 = sbr.rel (%p120) target = $region25
    $region24: #{tpu_custom_call.1} parent=1 // pred_region
      %v123 = vld [vmem:[#allocation7] sm:$0xff]
      %v124 = vld [vmem:[#allocation7 + $0x8] sm:$0xff]
      %v125 = vld [vmem:[#allocation7 + $0x10] sm:$0xff]
      %v126 = vld [vmem:[#allocation7 + $0x18] sm:$0xff]
      %v127 = vmul.f32 %v123, 0.00048828125
      %v128 = vmul.f32 %v124, 0.00048828125
      %v129 = vmul.f32 %v125, 0.00048828125
      %v130 = vmul.f32 %v126, 0.00048828125
      %131 = vst [vmem:[#allocation7] sm:$0xff] %v127
      %132 = vst [vmem:[#allocation7 + $0x8] sm:$0xff] %v128
      %133 = vst [vmem:[#allocation7 + $0x10] sm:$0xff] %v129
      %134 = vst [vmem:[#allocation7 + $0x18] sm:$0xff] %v130
    $region25: #{tpu_custom_call.1} parent=1 // pred_fallthru
      _
    // Predicated region
    $region26: #{tpu_custom_call.1} parent=1 // pred_check
      _
    $region27: #{tpu_custom_call.1} parent=1 // pred_check_branch
      %136 = sbr.rel (0) target = $region29
    $region28: #{tpu_custom_call.1} parent=1 // pred_region
      %138 = vsyncadd [#allocation4], 0
      %s139 = sshll.u32 [#allocation7], 4
      %s140 = int_to_ptr.vmem [resolvable:$true] %s139
      %s141 = sshll.u32 %s2, 4
      %s142 = int_to_ptr.hbm [resolvable:$true] %s141
      %147 = dma.vmem_to_hbm [thread:$0]  %s140, 512, %s142, [#allocation4], 128, 128, 8
    $region29: #{tpu_custom_call.1} parent=1 // pred_fallthru
      _
    // Predicated region
    $region30: #{tpu_custom_call.1} parent=1 // pred_check
      _
    $region31: #{tpu_custom_call.1} parent=1 // pred_check_branch
      %149 = sbr.rel (0) target = $region33
    $region32: #{tpu_custom_call.1} parent=1 // pred_region
      %151 = dma.done [#allocation4], 512
    $region33: #{tpu_custom_call.1} parent=1 // pred_fallthru
      _
    %152 = vsyncpa [#allocation3], 1
    %153 = vsyncpa [#allocation6], 1
    %154 = vsyncpa [#allocation4], 1

</llo_original>
